<compile_context>
chip_gen: v5e
topology: v5e:2x2
jax: 0.10.0
libtpu: 0.0.40
codegen_flags: <defaults>
</compile_context>

<pallas_src>
import jax
import jax.numpy as jnp
from jax.experimental import pallas as pl
from jax.experimental.pallas import tpu as pltpu

_LANES = 128
_SUBLANES = 8
_MAX_TILE_ROWS = 2048   # (2048,128) f32 = 1 MiB/tile; 2 inputs x 2 buffers = 4 MiB VMEM
_N_PAR = 2              # leading "parallel" grid axis (both TCs on v7x; no-op on 1-TC chips)


# --------------------------------------------------------------------------
# Helper: flatten to a lane-dense [rows, 128] slab with rows % 8 == 0.
# --------------------------------------------------------------------------
def _to_slab(a):
    flat = a.reshape(-1)
    n = flat.shape[0]
    pad = (-n) % (_SUBLANES * _LANES)
    if pad:
        # TODO(synk): only taken when numel % 1024 != 0 (not the common NCHW
        # case, not the demo). Zero padding is reduction-neutral: 0^2 adds
        # nothing and x / target are padded identically.
        flat = jnp.pad(flat, (0, pad))
    rows = flat.shape[0] // _LANES
    return flat.reshape(rows, _LANES), rows


# --------------------------------------------------------------------------
# Big memory-bound square-sum reductions (MSE numerator / Frobenius numerator).
# Grid = (parallel half, reduction steps). Each half accumulates into its own
# resident (8,128) f32 output block; the wrapper sums the 2*8*128 partials.
# --------------------------------------------------------------------------
def _row_mask(shape, row0, total_rows):
    ridx = row0 + jax.lax.broadcasted_iota(jnp.int32, shape, 0)
    return ridx < total_rows


def _make_sqdiff_kernel(tile_rows, total_rows):
    def kernel(x_ref, t_ref, o_ref):
        p = pl.program_id(0)
        i = pl.program_id(1)
        inner = pl.num_programs(1)

        @pl.when(i == 0)
        def _():
            o_ref[...] = jnp.zeros_like(o_ref)

        d = x_ref[...].astype(jnp.float32) - t_ref[...].astype(jnp.float32)
        sq = d * d
        row0 = (p * inner + i) * tile_rows
        sq = jnp.where(_row_mask(sq.shape, row0, total_rows), sq, 0.0)
        # Free reshape (native (8,128) tiling) + VPU adds into the resident acc.
        o_ref[0] += sq.reshape(-1, _SUBLANES, _LANES).sum(axis=0)

    return kernel


def _make_square_kernel(tile_rows, total_rows):
    def kernel(x_ref, o_ref):
        p = pl.program_id(0)
        i = pl.program_id(1)
        inner = pl.num_programs(1)

        @pl.when(i == 0)
        def _():
            o_ref[...] = jnp.zeros_like(o_ref)

        v = x_ref[...].astype(jnp.float32)
        sq = v * v
        row0 = (p * inner + i) * tile_rows
        sq = jnp.where(_row_mask(sq.shape, row0, total_rows), sq, 0.0)
        o_ref[0] += sq.reshape(-1, _SUBLANES, _LANES).sum(axis=0)

    return kernel


def _run_tiled_sq_reduce(kernel_maker, operands, rows):
    # rows is a multiple of 8 (guaranteed by _to_slab), so tile_rows is too.
    tile_rows = min(_MAX_TILE_ROWS, rows)
    n_tiles = pl.cdiv(rows, tile_rows)
    inner = pl.cdiv(n_tiles, _N_PAR)

    def in_map(p, i):
        # Clamp so duplicate / overhanging steps stay in-bounds; their rows are
        # masked to zero inside the kernel.
        return (jnp.minimum(p * inner + i, n_tiles - 1), 0)

    kernel = kernel_maker(tile_rows, rows)
    out = pl.pallas_call(
        kernel,
        out_shape=jax.ShapeDtypeStruct((_N_PAR, _SUBLANES, _LANES), jnp.float32),
        grid_spec=pltpu.PrefetchScalarGridSpec(
            num_scalar_prefetch=0,
            grid=(_N_PAR, inner),
            in_specs=[pl.BlockSpec((tile_rows, _LANES), in_map) for _ in operands],
            out_specs=pl.BlockSpec((1, _SUBLANES, _LANES), lambda p, i: (p, 0, 0)),
        ),
        compiler_params=pltpu.CompilerParams(
            dimension_semantics=("parallel", "arbitrary")),
    )(*operands)
    # Tiny (2*8*128) final reduce in plain XLA.
    return jnp.sum(out)


def mse_loss(x, target):
    n = x.size
    x2, rows = _to_slab(x)
    t2, _ = _to_slab(target)
    ssum = _run_tiled_sq_reduce(_make_sqdiff_kernel, (x2, t2), rows)
    return ssum / jnp.float32(n)


def frobenius_norm(y):
    y2, rows = _to_slab(y)
    return jnp.sqrt(_run_tiled_sq_reduce(_make_square_kernel, (y2,), rows))


# --------------------------------------------------------------------------
# torch.norm(v, p=2, dim=1).mean() for v of shape [B, D], blocked over B.
# --------------------------------------------------------------------------
def _make_l2norm_sum_kernel(tile_b, total_b):
    def kernel(v_ref, o_ref, acc_ref):
        i = pl.program_id(0)

        @pl.when(i == 0)
        def _():
            acc_ref[0, 0] = jnp.float32(0.0)

        v = v_ref[...].astype(jnp.float32)
        ridx = i * tile_b + jax.lax.broadcasted_iota(jnp.int32, v.shape, 0)
        v = jnp.where(ridx < total_b, v, 0.0)           # mask garbage tail rows
        sq = jnp.sum(v * v, axis=1, keepdims=True)      # [tile_b, 1]
        acc_ref[0, 0] += jnp.sum(jnp.sqrt(sq))

        @pl.when(i == pl.num_programs(0) - 1)
        def _():
            o_ref[0, 0] = acc_ref[0, 0]

    return kernel


def l2_norm_mean(v):
    B, D = v.shape
    tile_b = min(512, B)                 # either full dim or a multiple of 8
    grid = (pl.cdiv(B, tile_b),)
    out = pl.pallas_call(
        _make_l2norm_sum_kernel(tile_b, B),
        out_shape=jax.ShapeDtypeStruct((1, 1), jnp.float32),
        grid_spec=pltpu.PrefetchScalarGridSpec(
            num_scalar_prefetch=0,
            grid=grid,
            in_specs=[pl.BlockSpec((tile_b, D), lambda i: (i, 0))],
            out_specs=pl.BlockSpec(memory_space=pltpu.SMEM),
            scratch_shapes=[pltpu.SMEM((1, 1), jnp.float32)],
        ),
        compiler_params=pltpu.CompilerParams(
            dimension_semantics=("arbitrary",)),
    )(v)
    return out[0, 0] / jnp.float32(B)


# --------------------------------------------------------------------------
# Loss_with_Reg.forward
# --------------------------------------------------------------------------
def loss_with_reg(data, target):
    x, y = data[0], data[1]
    loss = mse_loss(x, target)                      # criterion_L(x, target)
    if isinstance(y, (list, tuple)):
        for v in y:
            loss = loss + l2_norm_mean(v)           # criterion_Reg(v, p=2, dim=1).mean()
    else:
        loss = loss + frobenius_norm(y)             # criterion_Reg(y)
    return loss


if __name__ == "__main__":
    key = jax.random.PRNGKey(0)
    kx, kt, k1, k2 = jax.random.split(key, 4)
    B, C, H, W, D = 2, 4, 16, 16, 32
    x = jax.random.normal(kx, (B, C, H, W), dtype=jnp.float32)
    target = jax.random.normal(kt, (B, C, H, W), dtype=jnp.float32)
    y = (jax.random.normal(k1, (B, D), dtype=jnp.float32),
         jax.random.normal(k2, (B, D), dtype=jnp.float32))

    loss = loss_with_reg((x, y), target)
    jax.block_until_ready(loss)

    # Pure-JAX reference check (tuple branch).
    ref = jnp.mean((x - target) ** 2)
    for v in y:
        ref = ref + jnp.mean(jnp.sqrt(jnp.sum(v * v, axis=1)))
    assert jnp.allclose(loss, ref, rtol=1e-5, atol=1e-5), (loss, ref)

    # Also exercise the scalar (Frobenius) branch.
    y_single = jax.random.normal(k1, (B, D), dtype=jnp.float32)
    loss2 = loss_with_reg((x, y_single), target)
    jax.block_until_ready(loss2)
    ref2 = jnp.mean((x - target) ** 2) + jnp.sqrt(jnp.sum(y_single ** 2))
    assert jnp.allclose(loss2, ref2, rtol=1e-5, atol=1e-5), (loss2, ref2)

    print("KERNEL_OK")
</pallas_src>

<mosaic_0001>
module attributes {stable_mosaic.version = 11 : i64} {
  func.func @kernel(%arg0: i32, %arg1: i32, %arg2: memref<16x128xf32, #tpu.memory_space<vmem>>, %arg3: memref<16x128xf32, #tpu.memory_space<vmem>>, %arg4: memref<1x8x128xf32, #tpu.memory_space<vmem>>) attributes {dimension_semantics = [#tpu.dimension_semantics<parallel>, #tpu.dimension_semantics<arbitrary>], iteration_bounds = array<i64: 2, 1>, scalar_prefetch = 0 : i64, scratch_operands = 0 : i64, tpu.core_type = #tpu.core_type<tc>, window_params = [{transform_indices = @transform_0, window_bounds = array<i64: 16, 128>}, {transform_indices = @transform_1, window_bounds = array<i64: 16, 128>}, {transform_indices = @transform_2, window_bounds = array<i64: 1, 8, 128>}]} {
    %c0_i32 = arith.constant 0 : i32
    %0 = arith.cmpi eq, %arg1, %c0_i32 : i32
    %1 = arith.extui %0 : i1 to i32
    %c0_i32_0 = arith.constant 0 : i32
    %2 = arith.cmpi ne, %1, %c0_i32_0 : i32
    scf.if %2 {
      %cst_12 = arith.constant 0.000000e+00 : f32
      %25 = vector.broadcast %cst_12 : f32 to vector<1x8x128xf32>
      %c0_13 = arith.constant 0 : index
      %c0_14 = arith.constant 0 : index
      %c0_15 = arith.constant 0 : index
      %26 = vector.load %arg4[%c0_13, %c0_14, %c0_15] : memref<1x8x128xf32, #tpu.memory_space<vmem>>, vector<1x8x128xf32>
      tpu.vector_store %arg4[%c0_13, %c0_14, %c0_15], %25 {strides = array<i32>} : memref<1x8x128xf32, #tpu.memory_space<vmem>>, vector<1x8x128xf32>,
    } else {
    }
    %c0 = arith.constant 0 : index
    %c0_1 = arith.constant 0 : index
    %3 = vector.load %arg2[%c0, %c0_1] : memref<16x128xf32, #tpu.memory_space<vmem>>, vector<16x128xf32>
    %c0_2 = arith.constant 0 : index
    %c0_3 = arith.constant 0 : index
    %4 = vector.load %arg3[%c0_2, %c0_3] : memref<16x128xf32, #tpu.memory_space<vmem>>, vector<16x128xf32>
    %5 = arith.subf %3, %4 : vector<16x128xf32>
    %6 = arith.mulf %5, %5 : vector<16x128xf32>
    %c1_i32 = arith.constant 1 : i32
    %7 = arith.muli %arg0, %c1_i32 : i32
    %8 = arith.addi %7, %arg1 : i32
    %c16_i32 = arith.constant 16 : i32
    %9 = arith.muli %8, %c16_i32 : i32
    %10 = tpu.iota {dimensions = array<i32: 0>} : vector<16x128xi32>
    %11 = vector.broadcast %9 : i32 to vector<16x128xi32>
    %12 = arith.addi %11, %10 : vector<16x128xi32>
    %c16_i32_4 = arith.constant 16 : i32
    %13 = vector.broadcast %c16_i32_4 : i32 to vector<16x128xi32>
    %14 = arith.cmpi slt, %12, %13 : vector<16x128xi32>
    %cst = arith.constant 0.000000e+00 : f32
    %15 = vector.broadcast %cst : f32 to vector<16x128xf32>
    %16 = arith.select %14, %6, %15 : vector<16x128xi1>, vector<16x128xf32>
    %c0_5 = arith.constant 0 : index
    %c0_6 = arith.constant 0 : index
    %c0_7 = arith.constant 0 : index
    %17 = vector.load %arg4[%c0_5, %c0_6, %c0_7] : memref<1x8x128xf32, #tpu.memory_space<vmem>>, vector<1x8x128xf32>
    %18 = vector.shape_cast %17 : vector<1x8x128xf32> to vector<8x128xf32>
    %19 = vector.shape_cast %16 : vector<16x128xf32> to vector<2x8x128xf32>
    %cst_8 = arith.constant dense<0.000000e+00> : vector<8x128xf32>
    %20 = vector.multi_reduction <add>, %19, %cst_8 [0] : vector<2x8x128xf32> to vector<8x128xf32>
    %21 = arith.addf %18, %20 : vector<8x128xf32>
    %c0_9 = arith.constant 0 : index
    %c0_10 = arith.constant 0 : index
    %c0_11 = arith.constant 0 : index
    %22 = vector.load %arg4[%c0_9, %c0_10, %c0_11] : memref<1x8x128xf32, #tpu.memory_space<vmem>>, vector<1x8x128xf32>
    %23 = vector.shape_cast %22 : vector<1x8x128xf32> to vector<8x128xf32>
    %24 = vector.shape_cast %21 : vector<8x128xf32> to vector<1x8x128xf32>
    tpu.vector_store %arg4[%c0_9, %c0_10, %c0_11], %24 {strides = array<i32>} : memref<1x8x128xf32, #tpu.memory_space<vmem>>, vector<1x8x128xf32>,
    return
  }
  func.func @transform_0(%arg0: i32, %arg1: i32) -> (i32, i32) {
    %c1_i32 = arith.constant 1 : i32
    %0 = arith.muli %arg0, %c1_i32 : i32
    %1 = arith.addi %0, %arg1 : i32
    %c0_i32 = arith.constant 0 : i32
    %2 = arith.minsi %1, %c0_i32 : i32
    %c0_i32_0 = arith.constant 0 : i32
    %c0_i32_1 = arith.constant 0 : i32
    return %2, %c0_i32_0 : i32, i32
  }
  func.func @transform_1(%arg0: i32, %arg1: i32) -> (i32, i32) {
    %c1_i32 = arith.constant 1 : i32
    %0 = arith.muli %arg0, %c1_i32 : i32
    %1 = arith.addi %0, %arg1 : i32
    %c0_i32 = arith.constant 0 : i32
    %2 = arith.minsi %1, %c0_i32 : i32
    %c0_i32_0 = arith.constant 0 : i32
    %c0_i32_1 = arith.constant 0 : i32
    return %2, %c0_i32_0 : i32, i32
  }
  func.func @transform_2(%arg0: i32, %arg1: i32) -> (i32, i32, i32) {
    %c0_i32 = arith.constant 0 : i32
    %c0_i32_0 = arith.constant 0 : i32
    %c0_i32_1 = arith.constant 0 : i32
    return %arg0, %c0_i32, %c0_i32_0 : i32, i32, i32
  }
}

</mosaic_0001>

<llo_original>
// kernel: tpu_custom_call.1
$region0: #{tpu_custom_call.1}
  #allocation0 [shape = 'u32[]', space=smem, size = 0x4, offset = 0x4, fixed_abs, tag = 'smem constant byte address 0x4 - core index']
  #allocation1 [shape = 'u32[72,128]{1,0:T(1,128)}', space=vmem, size = 0x9000, scoped, tag = 'internal scratch']
  %s0 = inlined_call_operand.hbm [shape: f32[16,128], index: 0, kind: input, shape index: {}]
  %s1 = inlined_call_operand.hbm [shape: f32[16,128], index: 1, kind: input, shape index: {}]
  %s2 = inlined_call_operand.hbm [shape: f32[2,8,128], index: 2, kind: output, shape index: {}]
  %s3 = sld [smem:[#allocation0]]
  $region53: #{tpu_custom_call.1} parent=0
    _
  %s5 = ssub.s32 1, %s3
  %s6 = scalar_select 0, %s5, %s3
  $region1: #{tpu_custom_call.1} parent=0
    #allocation2 [shape = 'u8[16384]{0}', space=vmem, size = 0x4000, scoped, tag = 'input window, operand 0']
    #allocation3 [shape = 's32[2]{0}', space=sflag, size = 0x8, scoped, tag = 'scoped memory for tpu_custom_call.1']
    #allocation4 [shape = 's32[2]{0}', space=sflag, size = 0x8, scoped, tag = 'scoped memory for tpu_custom_call.1']
    #allocation5 [shape = 'u8[16384]{0}', space=vmem, size = 0x4000, scoped, tag = 'input window, operand 1']
    #allocation6 [shape = 's32[2]{0}', space=sflag, size = 0x8, scoped, tag = 'scoped memory for tpu_custom_call.1']
    #allocation7 [shape = 'u8[8192]{0}', space=vmem, size = 0x2000, scoped, tag = 'output window, operand 0']
    %7 = vsyncpa [#allocation3], 0
    %s8 = scalar_lea.sflag [#allocation3], 1
    %9 = vsyncpa %s8, 0
    %10 = vsyncpa [#allocation6], 0
    %s11 = scalar_lea.sflag [#allocation6], 1
    %12 = vsyncpa %s11, 0
    %13 = vsyncpa [#allocation4], 0
    %s14 = scalar_lea.sflag [#allocation4], 1
    %15 = vsyncpa %s14, 0
    loop: start=0, step=1, limit=4
    $region2: #{tpu_custom_call.1} parent=1 // loop_pre_header
      _
    $region3: #{tpu_custom_call.1} parent=1 // loop_header
      %s17 = sphi 0, %s21
      %p18 = scmp.ge.s32.totalorder %s17, 4
      %s24 = sphi 0, %s36
      %s25 = sphi 0, %s32
      %s26 = sphi 0, %s24
      %s27 = sphi 0, %s25
      %s28 = sphi 0, %s26
      %s29 = sphi 0, %s27
      %s45 = sphi 0, %s47
      %s48 = sphi 0, %s45
      %s49 = sphi 0, %s48
      %s65 = sphi 0, %s49
      %s77 = sphi 0, %s79
      %s80 = sphi 0, %s77
      %s81 = sphi 0, %s80
      %s97 = sphi 0, %s81
      %s103 = sphi 0, %s105
      %s106 = sphi 0, %s103
      %s107 = sphi 0, %s106
      %s123 = sphi 0, %s107
    $region4: #{tpu_custom_call.1} parent=1 // loop_header_branch
      %20 = sbr.rel (%p18) target = $region8
    $region5: #{tpu_custom_call.1} parent=1 // loop_body
      %s22 = ssub.s32 %s17, 1
      %s23 = ssub.s32 %s17, 2
      %s30 = sadd.s32 1, %s25
      %p31 = scmp.ge.s32.totalorder %s30, 1
      %s32 = scalar_select %p31, 0, %s30
      %s33 = sadd.s32 1, %s24
      %s34 = scalar_select %p31, %s33, %s24
      %p35 = scmp.ge.s32.totalorder %s34, 2
      %s36 = scalar_select %p35, 0, %s34
      %s37 = sadd.s32 %s24, %s25
      %p38 = scmp.lt.s32.totalorder %s37, 0
      %s39 = scalar_select %p38, %s37, 0
      %s40 = sadd.s32 %s36, %s32
      %p41 = scmp.lt.s32.totalorder %s40, 0
      %s42 = scalar_select %p41, %s40, 0
      %s43 = ssub.s32 %s39, %s42
      %p44 = scmp.eq.s32.totalorder %s43, 0
      %s46 = sadd.s32 %s45, 1
      %s47 = scalar_select %p44, %s45, %s46
      %p50 = pneg %p44
      %p51 = scmp.eq.s32.totalorder %s17, 1
      %p52 = por %p50, %p51
      %p53 = scmp.ne.s32.totalorder %s45, %s48
      %p54 = scmp.eq.s32.totalorder %s17, 0
      %p55 = por %p53, %p54
      %p56 = scmp.ne.s32.totalorder %s45, %s48
      %p57 = scmp.eq.s32.totalorder %s22, 1
      %p58 = por %p56, %p57
      %p59 = scmp.ne.s32.totalorder %s48, %s49
      %p60 = scmp.eq.s32.totalorder %s22, 0
      %p61 = por %p59, %p60
      %p62 = scmp.ne.s32.totalorder %s48, %s49
      %p63 = scmp.eq.s32.totalorder %s23, 1
      %p64 = por %p62, %p63
      %p66 = scmp.ne.s32.totalorder %s49, %s65
      %p67 = scmp.eq.s32.totalorder %s23, 0
      %p68 = por %p66, %p67
      %s69 = sadd.s32 %s24, %s25
      %p70 = scmp.lt.s32.totalorder %s69, 0
      %s71 = scalar_select %p70, %s69, 0
      %s72 = sadd.s32 %s36, %s32
      %p73 = scmp.lt.s32.totalorder %s72, 0
      %s74 = scalar_select %p73, %s72, 0
      %s75 = ssub.s32 %s71, %s74
      %p76 = scmp.eq.s32.totalorder %s75, 0
      %s78 = sadd.s32 %s77, 1
      %s79 = scalar_select %p76, %s77, %s78
      %p82 = pneg %p76
      %p83 = scmp.eq.s32.totalorder %s17, 1
      %p84 = por %p82, %p83
      %p85 = scmp.ne.s32.totalorder %s77, %s80
      %p86 = scmp.eq.s32.totalorder %s17, 0
      %p87 = por %p85, %p86
      %p88 = scmp.ne.s32.totalorder %s77, %s80
      %p89 = scmp.eq.s32.totalorder %s22, 1
      %p90 = por %p88, %p89
      %p91 = scmp.ne.s32.totalorder %s80, %s81
      %p92 = scmp.eq.s32.totalorder %s22, 0
      %p93 = por %p91, %p92
      %p94 = scmp.ne.s32.totalorder %s80, %s81
      %p95 = scmp.eq.s32.totalorder %s23, 1
      %p96 = por %p94, %p95
      %p98 = scmp.ne.s32.totalorder %s81, %s97
      %p99 = scmp.eq.s32.totalorder %s23, 0
      %p100 = por %p98, %p99
      %s101 = ssub.s32 %s24, %s36
      %p102 = scmp.eq.s32.totalorder %s101, 0
      %s104 = sadd.s32 %s103, 1
      %s105 = scalar_select %p102, %s103, %s104
      %p108 = pneg %p102
      %p109 = scmp.eq.s32.totalorder %s17, 1
      %p110 = por %p108, %p109
      %p111 = scmp.ne.s32.totalorder %s103, %s106
      %p112 = scmp.eq.s32.totalorder %s17, 0
      %p113 = por %p111, %p112
      %p114 = scmp.ne.s32.totalorder %s103, %s106
      %p115 = scmp.eq.s32.totalorder %s22, 1
      %p116 = por %p114, %p115
      %p117 = scmp.ne.s32.totalorder %s106, %s107
      %p118 = scmp.eq.s32.totalorder %s22, 0
      %p119 = por %p117, %p118
      %p120 = scmp.ne.s32.totalorder %s106, %s107
      %p121 = scmp.eq.s32.totalorder %s23, 1
      %p122 = por %p120, %p121
      %p124 = scmp.ne.s32.totalorder %s107, %s123
      %p125 = scmp.eq.s32.totalorder %s23, 0
      %p126 = por %p124, %p125
      %p127 = scmp.le.s32.totalorder 1, %s17
      %p128 = scmp.lt.s32.totalorder %s17, 3
      %p129 = pnand %p127, %p128
      %p130 = pneg %p129
      // Predicated region
      $region9: #{tpu_custom_call.1} parent=5 // pred_check
        _
      $region10: #{tpu_custom_call.1} parent=5 // pred_check_branch
        %132 = sbr.rel (%p129) target = $region12
      $region11: #{tpu_custom_call.1} parent=5 // pred_region
        %s133 = ssub.s32 %s17, 1
      $region12: #{tpu_custom_call.1} parent=5 // pred_fallthru
        _
      %p134 = scmp.lt.s32.totalorder %s17, 2
      // Predicated region
      $region13: #{tpu_custom_call.1} parent=5 // pred_check
        %p135 = pneg %p134
      $region14: #{tpu_custom_call.1} parent=5 // pred_check_branch
        %137 = sbr.rel (%p135) target = $region16
      $region15: #{tpu_custom_call.1} parent=5 // pred_region
        // Predicated region
        $region17: #{tpu_custom_call.1} parent=15 // pred_check
          %p138 = pneg %p55
        $region18: #{tpu_custom_call.1} parent=15 // pred_check_branch
          %140 = sbr.rel (%p138) target = $region20
        $region19: #{tpu_custom_call.1} parent=15 // pred_region
          %s141 = sand.u32 %s45, 1
          %s142 = scalar_lea.sflag [#allocation3], %s141
          %s143 = sand.u32 %s45, 1
          %s144 = smul.addr %s143, 16
          %s145 = scalar_lea.vmem [#allocation2], %s144
          %s146 = sadd.s32 %s24, %s25
          %p147 = scmp.lt.s32.totalorder %s146, 0
          %s148 = scalar_select %p147, %s146, 0
          %s149 = smul.u32 2, %s148
          %151 = vsyncadd %s142, 0
          %s152 = smul.addr %s149, 8
          %s153 = scalar_lea.hbm %s0, %s152
          %s154 = sshll.u32 %s153, 4
          %s155 = int_to_ptr.hbm [resolvable:$true] %s154
          %s156 = sshll.u32 %s145, 4
          %s157 = int_to_ptr.vmem [resolvable:$true] %s156
          %162 = dma.hbm_to_vmem [thread:$0]  %s155, 256, %s157, %s142, 128, 128, 8
        $region20: #{tpu_custom_call.1} parent=15 // pred_fallthru
          _
        // Predicated region
        $region21: #{tpu_custom_call.1} parent=15 // pred_check
          %p163 = pneg %p87
        $region22: #{tpu_custom_call.1} parent=15 // pred_check_branch
          %165 = sbr.rel (%p163) target = $region24
        $region23: #{tpu_custom_call.1} parent=15 // pred_region
          %s166 = sand.u32 %s77, 1
          %s167 = scalar_lea.sflag [#allocation6], %s166
          %s168 = sand.u32 %s77, 1
          %s169 = smul.addr %s168, 16
          %s170 = scalar_lea.vmem [#allocation5], %s169
          %s171 = sadd.s32 %s24, %s25
          %p172 = scmp.lt.s32.totalorder %s171, 0
          %s173 = scalar_select %p172, %s171, 0
          %s174 = smul.u32 2, %s173
          %176 = vsyncadd %s167, 0
          %s177 = smul.addr %s174, 8
          %s178 = scalar_lea.hbm %s1, %s177
          %s179 = sshll.u32 %s178, 4
          %s180 = int_to_ptr.hbm [resolvable:$true] %s179
          %s181 = sshll.u32 %s170, 4
          %s182 = int_to_ptr.vmem [resolvable:$true] %s181
          %187 = dma.hbm_to_vmem [thread:$0]  %s180, 256, %s182, %s167, 128, 128, 8
        $region24: #{tpu_custom_call.1} parent=15 // pred_fallthru
          _
      $region16: #{tpu_custom_call.1} parent=5 // pred_fallthru
        _
      %p188 = scmp.le.s32.totalorder 1, %s17
      %p189 = scmp.lt.s32.totalorder %s17, 3
      %p190 = pnand %p188, %p189
      %p191 = pneg %p190
      // Predicated region
      $region25: #{tpu_custom_call.1} parent=5 // pred_check
        _
      $region26: #{tpu_custom_call.1} parent=5 // pred_check_branch
        %193 = sbr.rel (%p190) target = $region28
      $region27: #{tpu_custom_call.1} parent=5 // pred_region
        %s194 = ssub.s32 %s17, 1
        %s195 = sand.u32 %s48, 1
        %s196 = scalar_lea.sflag [#allocation3], %s195
        %s197 = sand.u32 %s48, 1
        %s198 = smul.addr %s197, 16
        %s199 = scalar_lea.vmem [#allocation2], %s198
        // Predicated region
        $region29: #{tpu_custom_call.1} parent=27 // pred_check
          %p200 = pneg %p61
        $region30: #{tpu_custom_call.1} parent=27 // pred_check_branch
          %202 = sbr.rel (%p200) target = $region32
        $region31: #{tpu_custom_call.1} parent=27 // pred_region
          %204 = dma.done %s196, 256
        $region32: #{tpu_custom_call.1} parent=27 // pred_fallthru
          _
        %s205 = sand.u32 %s80, 1
        %s206 = scalar_lea.sflag [#allocation6], %s205
        %s207 = sand.u32 %s80, 1
        %s208 = smul.addr %s207, 16
        %s209 = scalar_lea.vmem [#allocation5], %s208
        // Predicated region
        $region33: #{tpu_custom_call.1} parent=27 // pred_check
          %p210 = pneg %p93
        $region34: #{tpu_custom_call.1} parent=27 // pred_check_branch
          %212 = sbr.rel (%p210) target = $region36
        $region35: #{tpu_custom_call.1} parent=27 // pred_region
          %214 = dma.done %s206, 256
        $region36: #{tpu_custom_call.1} parent=27 // pred_fallthru
          _
        %s215 = sand.u32 %s48, 1
        %s216 = scalar_lea.sflag [#allocation3], %s215
        %s217 = sand.u32 %s48, 1
        %s218 = smul.addr %s217, 16
        %s219 = scalar_lea.vmem [#allocation2], %s218
        %p220 = pneg %p61
        %p221 = pneg %p58
        %s222 = sand.u32 %s80, 1
        %s223 = scalar_lea.sflag [#allocation6], %s222
        %s224 = sand.u32 %s80, 1
        %s225 = smul.addr %s224, 16
        %s226 = scalar_lea.vmem [#allocation5], %s225
        %p227 = pneg %p93
        %p228 = pneg %p90
        %p229 = pneg %p119
        %p230 = pneg %p116
        %s231 = sand.u32 %s106, 1
        %s232 = scalar_lea.sflag [#allocation4], %s231
        %s233 = sand.u32 %s106, 1
        %s234 = smul.addr %s233, 8
        %s235 = scalar_lea.vmem [#allocation7], %s234
        %s236 = sadd.s32 %s26, %s27
        %p237 = scmp.lt.s32.totalorder %s236, 0
        %s238 = scalar_select %p237, %s236, 0
        %s239 = smul.u32 2, %s238
        %s240 = sadd.s32 %s26, %s27
        %p241 = scmp.lt.s32.totalorder %s240, 0
        %s242 = scalar_select %p241, %s240, 0
        %s243 = smul.u32 2, %s242
        %p244 = scmp.eq.s32.totalorder %s27, 0
        // Predicated region
        $region37: #{tpu_custom_call.1} parent=27 // pred_check
          %p245 = pneg %p244
        $region38: #{tpu_custom_call.1} parent=27 // pred_check_branch
          %247 = sbr.rel (%p245) target = $region40
        $region39: #{tpu_custom_call.1} parent=27 // pred_region
          %248 = vst [vmem:[%s235] sm:$0xff] 0.0
        $region40: #{tpu_custom_call.1} parent=27 // pred_fallthru
          _
        %v249 = vld [vmem:[%s199] sm:$0xff]
        %v250 = vld [vmem:[%s199 + $0x8] sm:$0xff]
        %v251 = vld [vmem:[%s209] sm:$0xff]
        %v252 = vld [vmem:[%s209 + $0x8] sm:$0xff]
        %v253 = vsub.f32 %v249, %v251
        %v254 = vsub.f32 %v250, %v252
        %v255 = vmul.f32 %v253, %v253
        %v256 = vmul.f32 %v254, %v254
        %s257 = sadd.s32 %s26, %s27
        %s258 = smul.u32 %s257, 16
        %v259 = vlaneseq
        %v260 = vshrl.u32 %v259, 7
        %v261 = vadd.s32 %v260, 8
        %v262 = vstv %s258
        %v263 = vadd.s32 %v262, %v260
        %v264 = vadd.s32 %v262, %v261
        %vm265 = vcmp.lt.s32.totalorder %v263, 16
        %vm266 = vcmp.lt.s32.totalorder %v264, 16
        %v267 = vsel %vm265, %v255, 0.0
        %v268 = vsel %vm266, %v256, 0.0
        %v269 = vld [vmem:[%s235] sm:$0xff]
        %v270 = vadd.f32 %v267, %v268
        %v271 = vadd.f32 %v269, %v270
        %272 = vst [vmem:[%s235] sm:$0xff] %v271
        %s273 = sand.u32 %s106, 1
        %s274 = scalar_lea.sflag [#allocation4], %s273
        %s275 = sand.u32 %s106, 1
        %s276 = smul.addr %s275, 8
        %s277 = scalar_lea.vmem [#allocation7], %s276
        // Predicated region
        $region41: #{tpu_custom_call.1} parent=27 // pred_check
          %p278 = pneg %p116
        $region42: #{tpu_custom_call.1} parent=27 // pred_check_branch
          %280 = sbr.rel (%p278) target = $region44
        $region43: #{tpu_custom_call.1} parent=27 // pred_region
          %282 = vsyncadd %s274, 0
          %s283 = smul.addr %s26, 8
          %s284 = scalar_lea.hbm %s2, %s283
          %s286 = sshll.u32 %s277, 4
          %s287 = int_to_ptr.vmem [resolvable:$true] %s286
          %s288 = sshll.u32 %s284, 4
          %s289 = int_to_ptr.hbm [resolvable:$true] %s288
          %291 = dma.vmem_to_hbm [thread:$0]  %s287, 128, %s289, %s274
        $region44: #{tpu_custom_call.1} parent=27 // pred_fallthru
          _
      $region28: #{tpu_custom_call.1} parent=5 // pred_fallthru
        _
      %p292 = scmp.le.s32.totalorder 2, %s17
      // Predicated region
      $region45: #{tpu_custom_call.1} parent=5 // pred_check
        %p293 = pneg %p292
      $region46: #{tpu_custom_call.1} parent=5 // pred_check_branch
        %295 = sbr.rel (%p293) target = $region48
      $region47: #{tpu_custom_call.1} parent=5 // pred_region
        %s296 = ssub.s32 %s17, 2
        // Predicated region
        $region49: #{tpu_custom_call.1} parent=47 // pred_check
          %p297 = pneg %p122
        $region50: #{tpu_custom_call.1} parent=47 // pred_check_branch
          %299 = sbr.rel (%p297) target = $region52
        $region51: #{tpu_custom_call.1} parent=47 // pred_region
          %s300 = sand.u32 %s107, 1
          %s301 = scalar_lea.sflag [#allocation4], %s300
          %s302 = sand.u32 %s107, 1
          %s303 = smul.addr %s302, 8
          %s304 = scalar_lea.vmem [#allocation7], %s303
          %306 = dma.done %s301, 128
        $region52: #{tpu_custom_call.1} parent=47 // pred_fallthru
          _
      $region48: #{tpu_custom_call.1} parent=5 // pred_fallthru
        _
    $region6: #{tpu_custom_call.1} parent=1 // loop_footer
      %s21 = sadd.s32 1, %s17
    $region7: #{tpu_custom_call.1} parent=1 // loop_footer_branch
      %16 = sbr.rel target = $region3
    $region8: #{tpu_custom_call.1} parent=1 // loop_exit
      _
    %307 = vsyncpa [#allocation3], 1
    %s308 = scalar_lea.sflag [#allocation3], 1
    %309 = vsyncpa %s308, 1
    %310 = vsyncpa [#allocation6], 1
    %s311 = scalar_lea.sflag [#allocation6], 1
    %312 = vsyncpa %s311, 1
    %313 = vsyncpa [#allocation4], 1
    %s314 = scalar_lea.sflag [#allocation4], 1
    %315 = vsyncpa %s314, 1

</llo_original>
